<compile_context>
chip_gen: v6e
topology: v6e:2x2x1
jax: 0.10.0
libtpu: 0.0.40
codegen_flags: <defaults>
</compile_context>

<pallas_src>
import functools
import math

import jax
import jax.numpy as jnp
from jax import lax
from jax.experimental import pallas as pl
from jax.experimental.pallas import tpu as pltpu

_SQRT_HALF = 1.0 / math.sqrt(2.0)
_SQRT_2_OVER_PI = math.sqrt(2.0 / math.pi)


def _round_up(n: int, m: int) -> int:
    return ((n + m - 1) // m) * m


def _vmem_capacity_bytes() -> int:
    """Per-core VMEM capacity; conservative fallback if the query fails."""
    try:
        info = pltpu.get_tpu_info()
        cap = getattr(info, "vmem_capacity_bytes", None)
        if cap:
            return int(cap)
    except Exception:
        pass
    return 64 << 20  # v7x per-TC size; v5e/v6e have 128 MiB


def _vmem_footprint(tm, th, e_p, x_bytes, out_bytes, cb) -> int:
    """Approx VMEM bytes for one grid step with default double-buffering."""
    return (
        2 * tm * e_p * x_bytes          # x row tile (double-buffered)
        + 2 * tm * e_p * out_bytes      # output tile (double-buffered)
        + 4 * e_p * th * cb             # w1 + w2 H-tiles (double-buffered)
        + 4 * (th + e_p) * 4            # bias tiles (f32, double-buffered)
        + tm * e_p * 4                  # f32 accumulator scratch
        + tm * th * 4                   # f32 hidden intermediate
        + tm * max(e_p, th) * 4         # slack for elementwise temporaries
    )


def _select_tiles(m, e_p, h_p, x_bytes, out_bytes, cb, capacity):
    """Pick (tm, th) so the pipelined footprint fits the chip's VMEM."""
    budget = int(capacity * 0.7)
    # Bigger row tiles on chips with more VMEM (v5e/v6e: 128 MiB -> tm=512).
    tm_pref = 512 if capacity >= (96 << 20) else 256
    # Keep >= 2 M-steps when possible so the parallel axis can use both
    # TensorCores on v7x (and megacore on v5e/v6e).
    tm_cap = max(8, _round_up(pl.cdiv(m, 2), 8))
    tm_list = sorted({min(t, tm_cap) for t in (tm_pref, 256, 128, 64, 32, 16, 8)},
                     reverse=True)
    # Prefer fully-resident weights (th == H_p -> fetched once), then divisors.
    th_list = [h_p] + [t for t in (2048, 1024, 512, 256, 128)
                       if t < h_p and h_p % t == 0]
    for tm in tm_list:
        for th in th_list:
            if _vmem_footprint(tm, th, e_p, x_bytes, out_bytes, cb) <= budget:
                return tm, th
    return tm_list[-1], th_list[-1]


def mlp_kernel(x_ref, w1_ref, b1_ref, w2_ref, b2_ref, o_ref, acc_ref, *,
               exact_gelu: bool):
    k = pl.program_id(1)

    @pl.when(k == 0)
    def _init():
        acc_ref[...] = jnp.zeros_like(acc_ref)

    # Cast activations to the MXU compute dtype in-kernel (avoids a separate
    # wrapper-side pad/cast pass over x in HBM).
    x = x_ref[...].astype(w1_ref.dtype)

    # c_fc for this H tile: bf16 MXU operands, f32 accumulation.
    h = jnp.dot(x, w1_ref[...], preferred_element_type=jnp.float32)
    h = h + b1_ref[...]

    if exact_gelu:
        # erf GELU (exact nn.GELU() numerics).  erf has no EUP path and lowers
        # to ~20+ VALU ops/elem -- only worth it on v5e where the MXU hides it.
        h = 0.5 * h * (1.0 + lax.erf(h * _SQRT_HALF))
    else:
        # tanh-approx GELU: tanh routes to the EUP (free VLIW slot), leaving a
        # handful of cheap VALU mul/adds.  Max abs deviation from erf-GELU is
        # ~3e-3, well below the bf16 matmul rounding here.
        u = _SQRT_2_OVER_PI * (h + 0.044715 * (h * h * h))
        h = 0.5 * h * (1.0 + jnp.tanh(u))

    # c_proj for this H tile: accumulate into the f32 scratch.
    acc_ref[...] += jnp.dot(h.astype(w2_ref.dtype), w2_ref[...],
                            preferred_element_type=jnp.float32)

    @pl.when(k == pl.num_programs(1) - 1)
    def _finalize():
        y = acc_ref[...] + b2_ref[...]
        # dropout: p == 0 / eval mode -> identity.
        # TODO(synk): training-mode dropout via pltpu.prng_seed +
        #             pltpu.prng_random_bits with a per-grid-step seed offset.
        o_ref[...] = y.astype(o_ref.dtype)


def prepare_mlp_weights(w1, b1, w2, b2, *, compute_dtype=jnp.bfloat16):
    """Pad/cast the weights once (hoist out of the per-forward path and cache).

    w1: (E, 4E), b1: (4E,), w2: (4E, E), b2: (E,) in (in, out) layout, so the
    kernel computes y = x @ W + b (PyTorch Linear stores (out, in) / x @ W.T).
    """
    E, H = w1.shape
    E_p, H_p = _round_up(E, 128), _round_up(H, 128)
    w1_p = jnp.pad(w1.astype(compute_dtype), ((0, E_p - E), (0, H_p - H)))
    w2_p = jnp.pad(w2.astype(compute_dtype), ((0, H_p - H), (0, E_p - E)))
    b1_p = jnp.pad(b1.astype(jnp.float32)[None, :], ((0, 0), (0, H_p - H)))
    b2_p = jnp.pad(b2.astype(jnp.float32)[None, :], ((0, 0), (0, E_p - E)))
    return w1_p, b1_p, w2_p, b2_p


def mlp_pallas(x, w1_p, b1_p, w2_p, b2_p, *, exact_gelu=False):
    """nanoGPT MLP forward on pre-padded / pre-cast weights.

    x: (B, T, E) in its original dtype; weights from `prepare_mlp_weights`.
    """
    B, T, E = x.shape
    E_p, H_p = w1_p.shape
    assert w2_p.shape == (H_p, E_p) and E <= E_p
    M = B * T
    out_dtype = x.dtype

    cb = jnp.dtype(w1_p.dtype).itemsize
    x_b = jnp.dtype(x.dtype).itemsize
    o_b = jnp.dtype(out_dtype).itemsize

    x2 = x.reshape(M, E)
    if E_p != E:
        # Only needed when n_embd is not already lane-aligned (128).
        x2 = jnp.pad(x2, ((0, 0), (0, E_p - E)))
    # No M padding and no host-side bf16 cast: ragged M uses a cdiv grid with
    # masked boundary blocks; the compute-dtype cast happens inside the kernel.

    capacity = _vmem_capacity_bytes()
    tm, th = _select_tiles(M, E_p, H_p, x_b, o_b, cb, capacity)
    grid_m = pl.cdiv(M, tm)
    grid_k = H_p // th

    footprint = _vmem_footprint(tm, th, E_p, x_b, o_b, cb)
    vmem_limit = int(min(capacity - (4 << 20),
                         max(footprint + (8 << 20), 32 << 20)))

    # Weights are re-streamed once per M tile only when H is tiled (grid_k > 1);
    # with grid_k == 1 the block index is constant and they are fetched once.
    weight_bytes = 2 * E_p * H_p * cb * (grid_m if grid_k > 1 else 1)
    cost = pl.CostEstimate(
        flops=4 * M * E_p * H_p,          # two matmuls: 2*M*E*H each
        transcendentals=M * H_p,          # one tanh (or erf) per hidden element
        bytes_accessed=int(M * E_p * (x_b + o_b) + weight_bytes
                           + 4 * (H_p + E_p)),
    )

    kernel = functools.partial(mlp_kernel, exact_gelu=exact_gelu)

    out = pl.pallas_call(
        kernel,
        out_shape=jax.ShapeDtypeStruct((M, E_p), out_dtype),
        grid_spec=pltpu.PrefetchScalarGridSpec(
            num_scalar_prefetch=0,
            grid=(grid_m, grid_k),
            in_specs=[
                pl.BlockSpec((tm, E_p), lambda i, k: (i, 0)),   # x row tile
                # TODO(synk): when grid_k == 1 these blocks are constant-index;
                #             pipeline_mode=pl.Buffered(1) would halve their
                #             VMEM footprint (kept default-buffered for safety).
                pl.BlockSpec((E_p, th), lambda i, k: (0, k)),   # w1 H-tile
                pl.BlockSpec((1, th), lambda i, k: (0, k)),     # b1 H-tile
                pl.BlockSpec((th, E_p), lambda i, k: (k, 0)),   # w2 H-tile
                pl.BlockSpec((1, E_p), lambda i, k: (0, 0)),    # b2
            ],
            out_specs=pl.BlockSpec((tm, E_p), lambda i, k: (i, 0)),
            scratch_shapes=[pltpu.VMEM((tm, E_p), jnp.float32)],
        ),
        compiler_params=pltpu.CompilerParams(
            dimension_semantics=("parallel", "arbitrary"),
            vmem_limit_bytes=vmem_limit,
        ),
        cost_estimate=cost,
    )(x2, w1_p, b1_p, w2_p, b2_p)

    if E_p != E:
        out = out[:, :E]
    return out.reshape(B, T, E)


def mlp_forward(x, w1, b1, w2, b2, **kw):
    """Convenience one-shot path (weight prep NOT hoisted -- prefer caching
    prepare_mlp_weights() and calling mlp_pallas directly in real use)."""
    return mlp_pallas(x, *prepare_mlp_weights(w1, b1, w2, b2), **kw)


def mlp_reference(x, w1, b1, w2, b2):
    # Exact erf-GELU reference (matches torch nn.GELU() default).
    h = jnp.dot(x, w1) + b1
    h = 0.5 * h * (1.0 + lax.erf(h * _SQRT_HALF))
    return jnp.dot(h, w2) + b2


if __name__ == "__main__":
    # Small GPT-ish config: batch=2, seq=8, n_embd=32, hidden=4*32=128,
    # bias=True, dropout=0.0 (eval mode).
    B, T, E = 2, 8, 32
    H = 4 * E

    key = jax.random.PRNGKey(0)
    kx, k1, kb1, k2, kb2 = jax.random.split(key, 5)

    x = jax.random.normal(kx, (B, T, E), dtype=jnp.float32)
    w1 = jax.random.normal(k1, (E, H), dtype=jnp.float32) * (1.0 / math.sqrt(E))
    b1 = jax.random.normal(kb1, (H,), dtype=jnp.float32) * 0.02
    w2 = jax.random.normal(k2, (H, E), dtype=jnp.float32) * (1.0 / math.sqrt(H))
    b2 = jax.random.normal(kb2, (E,), dtype=jnp.float32) * 0.02

    # Prepare (pad + bf16-cast) the weights once, as a real model would cache.
    packed = prepare_mlp_weights(w1, b1, w2, b2)

    y = mlp_pallas(x, *packed)
    jax.block_until_ready(y)

    y_ref = mlp_reference(x, w1, b1, w2, b2)
    assert y.shape == (B, T, E)
    # bf16 MXU operands (f32 accumulation) + tanh-approx GELU vs f32 erf
    # reference: expected max abs error ~2-3e-2 at these shapes.
    assert jnp.allclose(y, y_ref, atol=5e-2, rtol=5e-2), (
        "mismatch vs f32 reference")

    print("KERNEL_OK")
</pallas_src>

<mosaic_0001>
module attributes {stable_mosaic.version = 11 : i64} {
  func.func @mlp_kernel(%arg0: i32, %arg1: i32, %arg2: memref<8x128xf32, #tpu.memory_space<vmem>>, %arg3: memref<128x128xbf16, #tpu.memory_space<vmem>>, %arg4: memref<1x128xf32, #tpu.memory_space<vmem>>, %arg5: memref<128x128xbf16, #tpu.memory_space<vmem>>, %arg6: memref<1x128xf32, #tpu.memory_space<vmem>>, %arg7: memref<8x128xf32, #tpu.memory_space<vmem>>, %arg8: memref<8x128xf32, #tpu.memory_space<vmem>>) attributes {dimension_semantics = [#tpu.dimension_semantics<parallel>, #tpu.dimension_semantics<arbitrary>], iteration_bounds = array<i64: 2, 1>, scalar_prefetch = 0 : i64, scratch_operands = 1 : i64, tpu.core_type = #tpu.core_type<tc>, window_params = [{transform_indices = @transform_0, window_bounds = array<i64: 8, 128>}, {transform_indices = @transform_1, window_bounds = array<i64: 128, 128>}, {transform_indices = @transform_2, window_bounds = array<i64: 1, 128>}, {transform_indices = @transform_3, window_bounds = array<i64: 128, 128>}, {pipeline_mode = #tpu.pipeline_mode<synchronous>, transform_indices = @transform_4, window_bounds = array<i64: 1, 128>}, {transform_indices = @transform_5, window_bounds = array<i64: 8, 128>}]} {
    %c0_i32 = arith.constant 0 : i32
    %0 = arith.cmpi eq, %arg1, %c0_i32 : i32
    %1 = arith.extui %0 : i1 to i32
    %c0_i32_0 = arith.constant 0 : i32
    %2 = arith.cmpi ne, %1, %c0_i32_0 : i32
    scf.if %2 {
      %cst_19 = arith.constant 0.000000e+00 : f32
      %32 = vector.broadcast %cst_19 : f32 to vector<8x128xf32>
      %c0_20 = arith.constant 0 : index
      %c0_21 = arith.constant 0 : index
      %33 = vector.load %arg8[%c0_20, %c0_21] : memref<8x128xf32, #tpu.memory_space<vmem>>, vector<8x128xf32>
      tpu.vector_store %arg8[%c0_20, %c0_21], %32 {strides = array<i32>} : memref<8x128xf32, #tpu.memory_space<vmem>>, vector<8x128xf32>,
    } else {
    }
    %c0 = arith.constant 0 : index
    %c0_1 = arith.constant 0 : index
    %3 = vector.load %arg2[%c0, %c0_1] : memref<8x128xf32, #tpu.memory_space<vmem>>, vector<8x128xf32>
    %4 = arith.truncf %3 : vector<8x128xf32> to vector<8x128xbf16>
    %c0_2 = arith.constant 0 : index
    %c0_3 = arith.constant 0 : index
    %5 = vector.load %arg3[%c0_2, %c0_3] : memref<128x128xbf16, #tpu.memory_space<vmem>>, vector<128x128xbf16>
    %cst = arith.constant dense<0.000000e+00> : vector<8x128xf32>
    %6 = tpu.matmul %4, %5, %cst {dimension_numbers = #tpu.dot_dimension_numbers<[1], [0], [0], [1], [0, 0, 1, 1], [], []>} : vector<8x128xbf16>, vector<128x128xbf16>, vector<8x128xf32> -> vector<8x128xf32>
    %c0_4 = arith.constant 0 : index
    %c0_5 = arith.constant 0 : index
    %7 = vector.load %arg4[%c0_4, %c0_5] : memref<1x128xf32, #tpu.memory_space<vmem>>, vector<1x128xf32>
    %8 = vector.broadcast %7 : vector<1x128xf32> to vector<8x128xf32>
    %9 = arith.addf %6, %8 : vector<8x128xf32>
    %10 = arith.mulf %9, %9 : vector<8x128xf32>
    %11 = arith.mulf %10, %9 : vector<8x128xf32>
    %cst_6 = arith.constant 4.471500e-02 : f32
    %12 = vector.broadcast %cst_6 : f32 to vector<8x128xf32>
    %13 = arith.mulf %12, %11 : vector<8x128xf32>
    %14 = arith.addf %9, %13 : vector<8x128xf32>
    %cst_7 = arith.constant 0.797884583 : f32
    %15 = vector.broadcast %cst_7 : f32 to vector<8x128xf32>
    %16 = arith.mulf %15, %14 : vector<8x128xf32>
    %cst_8 = arith.constant 5.000000e-01 : f32
    %17 = vector.broadcast %cst_8 : f32 to vector<8x128xf32>
    %18 = arith.mulf %17, %9 : vector<8x128xf32>
    %19 = math.tanh %16 : vector<8x128xf32>
    %cst_9 = arith.constant 1.000000e+00 : f32
    %20 = vector.broadcast %cst_9 : f32 to vector<8x128xf32>
    %21 = arith.addf %20, %19 : vector<8x128xf32>
    %22 = arith.mulf %18, %21 : vector<8x128xf32>
    %c0_10 = arith.constant 0 : index
    %c0_11 = arith.constant 0 : index
    %23 = vector.load %arg8[%c0_10, %c0_11] : memref<8x128xf32, #tpu.memory_space<vmem>>, vector<8x128xf32>
    %24 = arith.truncf %22 : vector<8x128xf32> to vector<8x128xbf16>
    %c0_12 = arith.constant 0 : index
    %c0_13 = arith.constant 0 : index
    %25 = vector.load %arg5[%c0_12, %c0_13] : memref<128x128xbf16, #tpu.memory_space<vmem>>, vector<128x128xbf16>
    %cst_14 = arith.constant dense<0.000000e+00> : vector<8x128xf32>
    %26 = tpu.matmul %24, %25, %cst_14 {dimension_numbers = #tpu.dot_dimension_numbers<[1], [0], [0], [1], [0, 0, 1, 1], [], []>} : vector<8x128xbf16>, vector<128x128xbf16>, vector<8x128xf32> -> vector<8x128xf32>
    %27 = arith.addf %23, %26 : vector<8x128xf32>
    %c0_15 = arith.constant 0 : index
    %c0_16 = arith.constant 0 : index
    %28 = vector.load %arg8[%c0_15, %c0_16] : memref<8x128xf32, #tpu.memory_space<vmem>>, vector<8x128xf32>
    tpu.vector_store %arg8[%c0_15, %c0_16], %27 {strides = array<i32>} : memref<8x128xf32, #tpu.memory_space<vmem>>, vector<8x128xf32>,
    %c0_i32_17 = arith.constant 0 : i32
    %29 = arith.cmpi eq, %arg1, %c0_i32_17 : i32
    %30 = arith.extui %29 : i1 to i32
    %c0_i32_18 = arith.constant 0 : i32
    %31 = arith.cmpi ne, %30, %c0_i32_18 : i32
    scf.if %31 {
      %c0_19 = arith.constant 0 : index
      %c0_20 = arith.constant 0 : index
      %32 = vector.load %arg8[%c0_19, %c0_20] : memref<8x128xf32, #tpu.memory_space<vmem>>, vector<8x128xf32>
      %c0_21 = arith.constant 0 : index
      %c0_22 = arith.constant 0 : index
      %33 = vector.load %arg6[%c0_21, %c0_22] : memref<1x128xf32, #tpu.memory_space<vmem>>, vector<1x128xf32>
      %34 = vector.broadcast %33 : vector<1x128xf32> to vector<8x128xf32>
      %35 = arith.addf %32, %34 : vector<8x128xf32>
      %c0_23 = arith.constant 0 : index
      %c0_24 = arith.constant 0 : index
      %36 = vector.load %arg7[%c0_23, %c0_24] : memref<8x128xf32, #tpu.memory_space<vmem>>, vector<8x128xf32>
      tpu.vector_store %arg7[%c0_23, %c0_24], %35 {strides = array<i32>} : memref<8x128xf32, #tpu.memory_space<vmem>>, vector<8x128xf32>,
    } else {
    }
    return
  }
  func.func @transform_0(%arg0: i32, %arg1: i32) -> (i32, i32) {
    %c0_i32 = arith.constant 0 : i32
    %c0_i32_0 = arith.constant 0 : i32
    return %arg0, %c0_i32 : i32, i32
  }
  func.func @transform_1(%arg0: i32, %arg1: i32) -> (i32, i32) {
    %c0_i32 = arith.constant 0 : i32
    %c0_i32_0 = arith.constant 0 : i32
    return %c0_i32, %arg1 : i32, i32
  }
  func.func @transform_2(%arg0: i32, %arg1: i32) -> (i32, i32) {
    %c0_i32 = arith.constant 0 : i32
    %c0_i32_0 = arith.constant 0 : i32
    return %c0_i32, %arg1 : i32, i32
  }
  func.func @transform_3(%arg0: i32, %arg1: i32) -> (i32, i32) {
    %c0_i32 = arith.constant 0 : i32
    %c0_i32_0 = arith.constant 0 : i32
    return %arg1, %c0_i32 : i32, i32
  }
  func.func @transform_4(%arg0: i32, %arg1: i32) -> (i32, i32) {
    %c0_i32 = arith.constant 0 : i32
    %c0_i32_0 = arith.constant 0 : i32
    %c0_i32_1 = arith.constant 0 : i32
    return %c0_i32, %c0_i32_0 : i32, i32
  }
  func.func @transform_5(%arg0: i32, %arg1: i32) -> (i32, i32) {
    %c0_i32 = arith.constant 0 : i32
    %c0_i32_0 = arith.constant 0 : i32
    return %arg0, %c0_i32 : i32, i32
  }
}

</mosaic_0001>

<llo_original>
// kernel: tpu_custom_call.1
$region0: #{tpu_custom_call.1}
  #allocation0 [shape = 'u32[]', space=smem, size = 0x4, offset = 0x4, fixed_abs, tag = 'smem constant byte address 0x4 - core index']
  #allocation1 [shape = 'u32[144,128]{1,0:T(1,128)}', space=vmem, size = 0x12000, scoped, tag = 'internal scratch']
  #allocation2 [shape = 'f32[8,128]{1,0:T(8,128)}', space=vmem, size = 0x1000, scoped, tag = 'scratch operand']
  %s0 = inlined_call_operand.hbm [shape: f32[16,128], index: 0, kind: input, shape index: {}]
  %s1 = inlined_call_operand.hbm [shape: bf16[128,128], index: 1, kind: input, shape index: {}]
  %s2 = inlined_call_operand.vmem [shape: f32[1,128], index: 2, kind: input, shape index: {}]
  %s3 = inlined_call_operand.hbm [shape: bf16[128,128], index: 3, kind: input, shape index: {}]
  %s4 = inlined_call_operand.vmem [shape: f32[1,128], index: 4, kind: input, shape index: {}]
  %s5 = inlined_call_operand.hbm [shape: f32[16,128], index: 5, kind: output, shape index: {}]
  %s6 = sld [smem:[#allocation0]]
  $region73: #{tpu_custom_call.1} parent=0
    _
  %s8 = ssub.s32 1, %s6
  %s9 = scalar_select 0, %s8, %s6
  $region1: #{tpu_custom_call.1} parent=0
    #allocation3 [shape = 'u8[8192]{0}', space=vmem, size = 0x2000, scoped, tag = 'input window, operand 0']
    #allocation4 [shape = 's32[2]{0}', space=sflag, size = 0x8, scoped, tag = 'scoped memory for tpu_custom_call.1']
    #allocation5 [shape = 's32[2]{0}', space=sflag, size = 0x8, scoped, tag = 'scoped memory for tpu_custom_call.1']
    #allocation6 [shape = 'u8[32768]{0}', space=vmem, size = 0x8000, scoped, tag = 'input window, operand 1, single buffered']
    #allocation7 [shape = 's32[1]{0}', space=sflag, size = 0x4, scoped, tag = 'scoped memory for tpu_custom_call.1']
    #allocation8 [shape = 'u8[32768]{0}', space=vmem, size = 0x8000, scoped, tag = 'input window, operand 3, single buffered']
    #allocation9 [shape = 'u8[8192]{0}', space=vmem, size = 0x2000, scoped, tag = 'output window, operand 0']
    %10 = vsyncpa [#allocation4], 0
    %s11 = scalar_lea.sflag [#allocation4], 1
    %12 = vsyncpa %s11, 0
    %13 = vsyncpa [#allocation7], 0
    %14 = vsyncpa [#allocation5], 0
    %s15 = scalar_lea.sflag [#allocation5], 1
    %16 = vsyncpa %s15, 0
    loop: start=0, step=1, limit=4
    $region2: #{tpu_custom_call.1} parent=1 // loop_pre_header
      _
    $region3: #{tpu_custom_call.1} parent=1 // loop_header
      %s18 = sphi 0, %s22
      %p19 = scmp.ge.s32.totalorder %s18, 4
      %s25 = sphi 0, %s37
      %s26 = sphi 0, %s33
      %s27 = sphi 0, %s25
      %s28 = sphi 0, %s26
      %s29 = sphi 0, %s27
      %s30 = sphi 0, %s28
      %s40 = sphi 0, %s42
      %s43 = sphi 0, %s40
      %s44 = sphi 0, %s43
      %s60 = sphi 0, %s44
      %s66 = sphi 0, %s68
      %s69 = sphi 0, %s66
      %s70 = sphi 0, %s69
      %s86 = sphi 0, %s70
      %s92 = sphi 0, %s94
      %s95 = sphi 0, %s92
      %s96 = sphi 0, %s95
      %s112 = sphi 0, %s96
      %s118 = sphi 0, %s120
      %s121 = sphi 0, %s118
      %s122 = sphi 0, %s121
      %s138 = sphi 0, %s122
      %s142 = sphi 0, %s142
      %s144 = sphi 0, %s142
      %s145 = sphi 0, %s144
      %s159 = sphi 0, %s145
      %s165 = sphi 0, %s167
      %s168 = sphi 0, %s165
      %s169 = sphi 0, %s168
      %s185 = sphi 0, %s169
    $region4: #{tpu_custom_call.1} parent=1 // loop_header_branch
      %21 = sbr.rel (%p19) target = $region8
    $region5: #{tpu_custom_call.1} parent=1 // loop_body
      %s23 = ssub.s32 %s18, 1
      %s24 = ssub.s32 %s18, 2
      %s31 = sadd.s32 1, %s26
      %p32 = scmp.ge.s32.totalorder %s31, 1
      %s33 = scalar_select %p32, 0, %s31
      %s34 = sadd.s32 1, %s25
      %s35 = scalar_select %p32, %s34, %s25
      %p36 = scmp.ge.s32.totalorder %s35, 2
      %s37 = scalar_select %p36, 0, %s35
      %s38 = ssub.s32 %s25, %s37
      %p39 = scmp.eq.s32.totalorder %s38, 0
      %s41 = sadd.s32 %s40, 1
      %s42 = scalar_select %p39, %s40, %s41
      %p45 = pneg %p39
      %p46 = scmp.eq.s32.totalorder %s18, 1
      %p47 = por %p45, %p46
      %p48 = scmp.ne.s32.totalorder %s40, %s43
      %p49 = scmp.eq.s32.totalorder %s18, 0
      %p50 = por %p48, %p49
      %p51 = scmp.ne.s32.totalorder %s40, %s43
      %p52 = scmp.eq.s32.totalorder %s23, 1
      %p53 = por %p51, %p52
      %p54 = scmp.ne.s32.totalorder %s43, %s44
      %p55 = scmp.eq.s32.totalorder %s23, 0
      %p56 = por %p54, %p55
      %p57 = scmp.ne.s32.totalorder %s43, %s44
      %p58 = scmp.eq.s32.totalorder %s24, 1
      %p59 = por %p57, %p58
      %p61 = scmp.ne.s32.totalorder %s44, %s60
      %p62 = scmp.eq.s32.totalorder %s24, 0
      %p63 = por %p61, %p62
      %s64 = ssub.s32 %s26, %s33
      %p65 = scmp.eq.s32.totalorder %s64, 0
      %s67 = sadd.s32 %s66, 1
      %s68 = scalar_select %p65, %s66, %s67
      %p71 = pneg %p65
      %p72 = scmp.eq.s32.totalorder %s18, 1
      %p73 = por %p71, %p72
      %p74 = scmp.ne.s32.totalorder %s66, %s69
      %p75 = scmp.eq.s32.totalorder %s18, 0
      %p76 = por %p74, %p75
      %p77 = scmp.ne.s32.totalorder %s66, %s69
      %p78 = scmp.eq.s32.totalorder %s23, 1
      %p79 = por %p77, %p78
      %p80 = scmp.ne.s32.totalorder %s69, %s70
      %p81 = scmp.eq.s32.totalorder %s23, 0
      %p82 = por %p80, %p81
      %p83 = scmp.ne.s32.totalorder %s69, %s70
      %p84 = scmp.eq.s32.totalorder %s24, 1
      %p85 = por %p83, %p84
      %p87 = scmp.ne.s32.totalorder %s70, %s86
      %p88 = scmp.eq.s32.totalorder %s24, 0
      %p89 = por %p87, %p88
      %s90 = ssub.s32 %s26, %s33
      %p91 = scmp.eq.s32.totalorder %s90, 0
      %s93 = sadd.s32 %s92, 1
      %s94 = scalar_select %p91, %s92, %s93
      %p97 = pneg %p91
      %p98 = scmp.eq.s32.totalorder %s18, 1
      %p99 = por %p97, %p98
      %p100 = scmp.ne.s32.totalorder %s92, %s95
      %p101 = scmp.eq.s32.totalorder %s18, 0
      %p102 = por %p100, %p101
      %p103 = scmp.ne.s32.totalorder %s92, %s95
      %p104 = scmp.eq.s32.totalorder %s23, 1
      %p105 = por %p103, %p104
      %p106 = scmp.ne.s32.totalorder %s95, %s96
      %p107 = scmp.eq.s32.totalorder %s23, 0
      %p108 = por %p106, %p107
      %p109 = scmp.ne.s32.totalorder %s95, %s96
      %p110 = scmp.eq.s32.totalorder %s24, 1
      %p111 = por %p109, %p110
      %p113 = scmp.ne.s32.totalorder %s96, %s112
      %p114 = scmp.eq.s32.totalorder %s24, 0
      %p115 = por %p113, %p114
      %s116 = ssub.s32 %s26, %s33
      %p117 = scmp.eq.s32.totalorder %s116, 0
      %s119 = sadd.s32 %s118, 1
      %s120 = scalar_select %p117, %s118, %s119
      %p123 = pneg %p117
      %p124 = scmp.eq.s32.totalorder %s18, 1
      %p125 = por %p123, %p124
      %p126 = scmp.ne.s32.totalorder %s118, %s121
      %p127 = scmp.eq.s32.totalorder %s18, 0
      %p128 = por %p126, %p127
      %p129 = scmp.ne.s32.totalorder %s118, %s121
      %p130 = scmp.eq.s32.totalorder %s23, 1
      %p131 = por %p129, %p130
      %p132 = scmp.ne.s32.totalorder %s121, %s122
      %p133 = scmp.eq.s32.totalorder %s23, 0
      %p134 = por %p132, %p133
      %p135 = scmp.ne.s32.totalorder %s121, %s122
      %p136 = scmp.eq.s32.totalorder %s24, 1
      %p137 = por %p135, %p136
      %p139 = scmp.ne.s32.totalorder %s122, %s138
      %p140 = scmp.eq.s32.totalorder %s24, 0
      %p141 = por %p139, %p140
      %s143 = sadd.s32 %s142, 1
      %p146 = scmp.eq.s32.totalorder %s18, 1
      %p147 = scmp.ne.s32.totalorder %s142, %s144
      %p148 = scmp.eq.s32.totalorder %s18, 0
      %p149 = por %p147, %p148
      %p150 = scmp.ne.s32.totalorder %s142, %s144
      %p151 = scmp.eq.s32.totalorder %s23, 1
      %p152 = por %p150, %p151
      %p153 = scmp.ne.s32.totalorder %s144, %s145
      %p154 = scmp.eq.s32.totalorder %s23, 0
      %p155 = por %p153, %p154
      %p156 = scmp.ne.s32.totalorder %s144, %s145
      %p157 = scmp.eq.s32.totalorder %s24, 1
      %p158 = por %p156, %p157
      %p160 = scmp.ne.s32.totalorder %s145, %s159
      %p161 = scmp.eq.s32.totalorder %s24, 0
      %p162 = por %p160, %p161
      %s163 = ssub.s32 %s25, %s37
      %p164 = scmp.eq.s32.totalorder %s163, 0
      %s166 = sadd.s32 %s165, 1
      %s167 = scalar_select %p164, %s165, %s166
      %p170 = pneg %p164
      %p171 = scmp.eq.s32.totalorder %s18, 1
      %p172 = por %p170, %p171
      %p173 = scmp.ne.s32.totalorder %s165, %s168
      %p174 = scmp.eq.s32.totalorder %s18, 0
      %p175 = por %p173, %p174
      %p176 = scmp.ne.s32.totalorder %s165, %s168
      %p177 = scmp.eq.s32.totalorder %s23, 1
      %p178 = por %p176, %p177
      %p179 = scmp.ne.s32.totalorder %s168, %s169
      %p180 = scmp.eq.s32.totalorder %s23, 0
      %p181 = por %p179, %p180
      %p182 = scmp.ne.s32.totalorder %s168, %s169
      %p183 = scmp.eq.s32.totalorder %s24, 1
      %p184 = por %p182, %p183
      %p186 = scmp.ne.s32.totalorder %s169, %s185
      %p187 = scmp.eq.s32.totalorder %s24, 0
      %p188 = por %p186, %p187
      %p189 = scmp.le.s32.totalorder 1, %s18
      %p190 = scmp.lt.s32.totalorder %s18, 3
      %p191 = pnand %p189, %p190
      %p192 = pneg %p191
      // Predicated region
      $region9: #{tpu_custom_call.1} parent=5 // pred_check
        _
      $region10: #{tpu_custom_call.1} parent=5 // pred_check_branch
        %194 = sbr.rel (%p191) target = $region12
      $region11: #{tpu_custom_call.1} parent=5 // pred_region
        %s195 = ssub.s32 %s18, 1
        // Predicated region
        $region13: #{tpu_custom_call.1} parent=11 // pred_check
          %p196 = pneg %p82
        $region14: #{tpu_custom_call.1} parent=11 // pred_check_branch
          %198 = sbr.rel (%p196) target = $region16
        $region15: #{tpu_custom_call.1} parent=11 // pred_region
          %s200 = ssub.s32 1024, 1024
          %201 = vsyncadd [#allocation7], %s200
          %s202 = smul.addr %s28, 64
          %s203 = scalar_lea.hbm %s1, %s202
          %s204 = sshll.u32 [#allocation6], 4
          %s205 = int_to_ptr.vmem [resolvable:$true] %s204
          %210 = dma.hbm_to_vmem [thread:$0]  %s203, 1024, %s205, [#allocation7], 64, 64, 4
        $region16: #{tpu_custom_call.1} parent=11 // pred_fallthru
          _
        // Predicated region
        $region17: #{tpu_custom_call.1} parent=11 // pred_check
          %p211 = pneg %p108
        $region18: #{tpu_custom_call.1} parent=11 // pred_check_branch
          %213 = sbr.rel (%p211) target = $region20
        $region19: #{tpu_custom_call.1} parent=11 // pred_region
          %p214 = scmp.lt.s32.totalorder %s28, 0
          %s215 = scalar_select %p214, %s28, 0
          %s216 = scalar_lea.vmem %s2, %s215
        $region20: #{tpu_custom_call.1} parent=11 // pred_fallthru
          _
        // Predicated region
        $region21: #{tpu_custom_call.1} parent=11 // pred_check
          %p217 = pneg %p134
        $region22: #{tpu_custom_call.1} parent=11 // pred_check_branch
          %219 = sbr.rel (%p217) target = $region24
        $region23: #{tpu_custom_call.1} parent=11 // pred_region
          %s220 = smul.u32 16, %s28
          %s222 = ssub.s32 1024, 1024
          %223 = vsyncadd [#allocation7], %s222
          %s224 = smul.addr %s220, 64
          %s225 = scalar_lea.hbm %s3, %s224
          %s226 = sshll.u32 [#allocation8], 4
          %s227 = int_to_ptr.vmem [resolvable:$true] %s226
          %232 = dma.hbm_to_vmem [thread:$0]  %s225, 1024, %s227, [#allocation7], 64, 64, 4
        $region24: #{tpu_custom_call.1} parent=11 // pred_fallthru
          _
        // Predicated region
        $region25: #{tpu_custom_call.1} parent=11 // pred_check
          %p233 = pneg %p155
        $region26: #{tpu_custom_call.1} parent=11 // pred_check_branch
          %235 = sbr.rel (%p233) target = $region28
        $region27: #{tpu_custom_call.1} parent=11 // pred_region
          _
        $region28: #{tpu_custom_call.1} parent=11 // pred_fallthru
          _
      $region12: #{tpu_custom_call.1} parent=5 // pred_fallthru
        _
      %p236 = scmp.lt.s32.totalorder %s18, 2
      // Predicated region
      $region29: #{tpu_custom_call.1} parent=5 // pred_check
        %p237 = pneg %p236
      $region30: #{tpu_custom_call.1} parent=5 // pred_check_branch
        %239 = sbr.rel (%p237) target = $region32
      $region31: #{tpu_custom_call.1} parent=5 // pred_region
        // Predicated region
        $region33: #{tpu_custom_call.1} parent=31 // pred_check
          %p240 = pneg %p50
        $region34: #{tpu_custom_call.1} parent=31 // pred_check_branch
          %242 = sbr.rel (%p240) target = $region36
        $region35: #{tpu_custom_call.1} parent=31 // pred_region
          %s243 = sand.u32 %s40, 1
          %s244 = scalar_lea.sflag [#allocation4], %s243
          %s245 = sand.u32 %s40, 1
          %s246 = smul.addr %s245, 8
          %s247 = scalar_lea.vmem [#allocation3], %s246
          %s249 = ssub.s32 128, 128
          %250 = vsyncadd %s244, %s249
          %s251 = smul.addr %s25, 128
          %s252 = scalar_lea.hbm %s0, %s251
          %s254 = sshll.u32 %s247, 4
          %s255 = int_to_ptr.vmem [resolvable:$true] %s254
          %257 = dma.hbm_to_vmem [thread:$0]  %s252, 128, %s255, %s244
        $region36: #{tpu_custom_call.1} parent=31 // pred_fallthru
          _
      $region32: #{tpu_custom_call.1} parent=5 // pred_fallthru
        _
      %p258 = scmp.le.s32.totalorder 1, %s18
      %p259 = scmp.lt.s32.totalorder %s18, 3
      %p260 = pnand %p258, %p259
      %p261 = pneg %p260
      // Predicated region
      $region37: #{tpu_custom_call.1} parent=5 // pred_check
        _
      $region38: #{tpu_custom_call.1} parent=5 // pred_check_branch
        %263 = sbr.rel (%p260) target = $region40
      $region39: #{tpu_custom_call.1} parent=5 // pred_region
        %s264 = ssub.s32 %s18, 1
        %s265 = sand.u32 %s43, 1
        %s266 = scalar_lea.sflag [#allocation4], %s265
        %s267 = sand.u32 %s43, 1
        %s268 = smul.addr %s267, 8
        %s269 = scalar_lea.vmem [#allocation3], %s268
        // Predicated region
        $region41: #{tpu_custom_call.1} parent=39 // pred_check
          %p270 = pneg %p56
        $region42: #{tpu_custom_call.1} parent=39 // pred_check_branch
          %272 = sbr.rel (%p270) target = $region44
        $region43: #{tpu_custom_call.1} parent=39 // pred_region
          %273 = dma.done %s266, 128
        $region44: #{tpu_custom_call.1} parent=39 // pred_fallthru
          _
        // Predicated region
        $region45: #{tpu_custom_call.1} parent=39 // pred_check
          %p274 = pneg %p82
        $region46: #{tpu_custom_call.1} parent=39 // pred_check_branch
          %276 = sbr.rel (%p274) target = $region48
        $region47: #{tpu_custom_call.1} parent=39 // pred_region
          %277 = dma.done [#allocation7], 1024
        $region48: #{tpu_custom_call.1} parent=39 // pred_fallthru
          _
        // Predicated region
        $region49: #{tpu_custom_call.1} parent=39 // pred_check
          %p278 = pneg %p134
        $region50: #{tpu_custom_call.1} parent=39 // pred_check_branch
          %280 = sbr.rel (%p278) target = $region52
        $region51: #{tpu_custom_call.1} parent=39 // pred_region
          %281 = dma.done [#allocation7], 1024
        $region52: #{tpu_custom_call.1} parent=39 // pred_fallthru
          _
        %s282 = sand.u32 %s43, 1
        %s283 = scalar_lea.sflag [#allocation4], %s282
        %s284 = sand.u32 %s43, 1
        %s285 = smul.addr %s284, 8
        %s286 = scalar_lea.vmem [#allocation3], %s285
        %p287 = pneg %p56
        %p288 = pneg %p53
        %p289 = pneg %p82
        %p290 = pneg %p79
        %p291 = scmp.lt.s32.totalorder %s28, 0
        %s292 = scalar_select %p291, %s28, 0
        %s293 = scalar_lea.vmem %s2, %s292
        %p294 = pneg %p108
        %p295 = pneg %p105
        %p296 = pneg %p134
        %p297 = pneg %p131
        %p298 = pneg %p155
        %p299 = pneg %p152
        %p300 = pneg %p181
        %p301 = pneg %p178
        %s302 = sand.u32 %s168, 1
        %s303 = scalar_lea.sflag [#allocation5], %s302
        %s304 = sand.u32 %s168, 1
        %s305 = smul.addr %s304, 8
        %s306 = scalar_lea.vmem [#allocation9], %s305
        %p307 = scmp.lt.s32.totalorder %s28, 0
        %s308 = scalar_select %p307, %s28, 0
        %s309 = scalar_lea.vmem %s2, %s308
        %s310 = smul.u32 16, %s28
        %p312 = scmp.eq.s32.totalorder %s28, 0
        // Predicated region
        $region53: #{tpu_custom_call.1} parent=39 // pred_check
          %p313 = pneg %p312
        $region54: #{tpu_custom_call.1} parent=39 // pred_check_branch
          %315 = sbr.rel (%p313) target = $region56
        $region55: #{tpu_custom_call.1} parent=39 // pred_region
          %316 = vst [vmem:[#allocation2] sm:$0xff] 0.0
        $region56: #{tpu_custom_call.1} parent=39 // pred_fallthru
          _
        %v317 = vld [vmem:[%s269] sm:$0xff]
        %v318 = vpack.c.bf16 %v317, %v317
        %v319 = vld [vmem:[#allocation6] sm:$0xf]
        %v320 = vld [vmem:[#allocation6 + $0x4] sm:$0xf]
        %v321 = vld [vmem:[#allocation6 + $0x8] sm:$0xf]
        %v322 = vld [vmem:[#allocation6 + $0xc] sm:$0xf]
        %v323 = vld [vmem:[#allocation6 + $0x10] sm:$0xf]
        %v324 = vld [vmem:[#allocation6 + $0x14] sm:$0xf]
        %v325 = vld [vmem:[#allocation6 + $0x18] sm:$0xf]
        %v326 = vld [vmem:[#allocation6 + $0x1c] sm:$0xf]
        %v327 = vld [vmem:[#allocation6 + $0x20] sm:$0xf]
        %v328 = vld [vmem:[#allocation6 + $0x24] sm:$0xf]
        %v329 = vld [vmem:[#allocation6 + $0x28] sm:$0xf]
        %v330 = vld [vmem:[#allocation6 + $0x2c] sm:$0xf]
        %v331 = vld [vmem:[#allocation6 + $0x30] sm:$0xf]
        %v332 = vld [vmem:[#allocation6 + $0x34] sm:$0xf]
        %v333 = vld [vmem:[#allocation6 + $0x38] sm:$0xf]
        %v334 = vld [vmem:[#allocation6 + $0x3c] sm:$0xf]
        %v335 = vld [vmem:[%s309] sm:$0x1]
        %v337 = vlaneseq
        %v338 = vshrl.u32 %v337, 7
        %v339 = vsub.s32 0, %v338
        %v340 = vrot.slane %v335, %v339
        %v358 = vunpack.c.l.b16 %v319
        %v359 = vunpack.c.l.b16 %v320
        %v360 = vunpack.c.l.b16 %v321
        %v361 = vunpack.c.l.b16 %v322
        %v362 = vunpack.c.l.b16 %v323
        %v363 = vunpack.c.l.b16 %v324
        %v364 = vunpack.c.l.b16 %v325
        %v365 = vunpack.c.l.b16 %v326
        %v366 = vunpack.c.l.b16 %v327
        %v367 = vunpack.c.l.b16 %v328
        %v368 = vunpack.c.l.b16 %v329
        %v369 = vunpack.c.l.b16 %v330
        %v370 = vunpack.c.l.b16 %v331
        %v371 = vunpack.c.l.b16 %v332
        %v372 = vunpack.c.l.b16 %v333
        %v373 = vunpack.c.l.b16 %v334
        %v374 = vpack.c.b16 %v359, %v358
        %v375 = vpack.c.b16 %v361, %v360
        %v376 = vpack.c.b16 %v363, %v362
        %v377 = vpack.c.b16 %v365, %v364
        %v378 = vpack.c.b16 %v367, %v366
        %v379 = vpack.c.b16 %v369, %v368
        %v380 = vpack.c.b16 %v371, %v370
        %v381 = vpack.c.b16 %v373, %v372
        %390 = vmatprep.subr.bf16.mxu0 0
        %391 = vmatpush1.bf16.msra.mxu0 %v381
        %392 = vmatprep.subr.bf16.mxu0 0
        %393 = vmatpush1.bf16.msra.mxu0 %v380
        %394 = vmatprep.subr.bf16.mxu0 0
        %395 = vmatpush1.bf16.msra.mxu0 %v379
        %396 = vmatprep.subr.bf16.mxu0 0
        %397 = vmatpush1.bf16.msra.mxu0 %v378
        %398 = vmatprep.subr.bf16.mxu0 0
        %399 = vmatpush1.bf16.msra.mxu0 %v377
        %400 = vmatprep.subr.bf16.mxu0 0
        %401 = vmatpush1.bf16.msra.mxu0 %v376
        %402 = vmatprep.subr.bf16.mxu0 0
        %403 = vmatpush1.bf16.msra.mxu0 %v375
        %404 = vmatprep.subr.bf16.mxu0 0
        %405 = vmatpush1.bf16.msra.mxu0 %v374
        %406 = vmatprep.subr.bf16.mxu0 0
        %407 = vmatpush2.bf16.msra.mxu0 0
        %408 = vmatprep.subr.bf16.mxu0 0
        %409 = vmatpush2.bf16.msra.mxu0 0
        %410 = vmatprep.subr.bf16.mxu0 0
        %411 = vmatpush2.bf16.msra.mxu0 0
        %412 = vmatprep.subr.bf16.mxu0 0
        %413 = vmatpush2.bf16.msra.mxu0 0
        %414 = vmatprep.subr.bf16.mxu0 0
        %415 = vmatpush2.bf16.msra.mxu0 0
        %416 = vmatprep.subr.bf16.mxu0 0
        %417 = vmatpush2.bf16.msra.mxu0 0
        %418 = vmatprep.subr.bf16.mxu0 0
        %419 = vmatpush2.bf16.msra.mxu0 0
        %420 = vmatprep.subr.bf16.mxu0 0
        %421 = vmatpush2.bf16.msra.mxu0 0
        %422 = vmatprep.mubr.bf16.mxu0 0
        %423 = vmatmul.mubr.bf16.gmra.mxu0 %v318
        %v424 = vpop.f32.mrf.mxu0
        %v425 = vadd.f32 %v340, %v424
        %v426 = vpop.f32.mrf.mxu0
        %v427 = vpop.f32.mrf.mxu0
        %v428 = vpop.f32.mrf.mxu0
        %429 = vdwg.mxu0
        %v430 = vmul.f32 %v425, %v425
        %v431 = vmul.f32 %v430, %v425
        %v432 = vmul.f32 %v431, 0.044715
        %v433 = vadd.f32 %v425, %v432
        %v434 = vmul.f32 %v433, 0.7978846
        %v435 = vmul.f32 %v425, 0.5
        %v436 = vtanh.pop %v434
        %v437 = vadd.f32 %v436, 1.0
        %v438 = vmul.f32 %v435, %v437
        %v439 = vld [vmem:[#allocation2] sm:$0xff]
        %v440 = vpack.c.bf16 %v438, %v438
        %v441 = vld [vmem:[#allocation8] sm:$0xf]
        %v442 = vld [vmem:[#allocation8 + $0x4] sm:$0xf]
        %v443 = vld [vmem:[#allocation8 + $0x8] sm:$0xf]
        %v444 = vld [vmem:[#allocation8 + $0xc] sm:$0xf]
        %v445 = vld [vmem:[#allocation8 + $0x10] sm:$0xf]
        %v446 = vld [vmem:[#allocation8 + $0x14] sm:$0xf]
        %v447 = vld [vmem:[#allocation8 + $0x18] sm:$0xf]
        %v448 = vld [vmem:[#allocation8 + $0x1c] sm:$0xf]
        %v449 = vld [vmem:[#allocation8 + $0x20] sm:$0xf]
        %v450 = vld [vmem:[#allocation8 + $0x24] sm:$0xf]
        %v451 = vld [vmem:[#allocation8 + $0x28] sm:$0xf]
        %v452 = vld [vmem:[#allocation8 + $0x2c] sm:$0xf]
        %v453 = vld [vmem:[#allocation8 + $0x30] sm:$0xf]
        %v454 = vld [vmem:[#allocation8 + $0x34] sm:$0xf]
        %v455 = vld [vmem:[#allocation8 + $0x38] sm:$0xf]
        %v456 = vld [vmem:[#allocation8 + $0x3c] sm:$0xf]
        %v473 = vunpack.c.l.b16 %v441
        %v474 = vunpack.c.l.b16 %v442
        %v475 = vunpack.c.l.b16 %v443
        %v476 = vunpack.c.l.b16 %v444
        %v477 = vunpack.c.l.b16 %v445
        %v478 = vunpack.c.l.b16 %v446
        %v479 = vunpack.c.l.b16 %v447
        %v480 = vunpack.c.l.b16 %v448
        %v481 = vunpack.c.l.b16 %v449
        %v482 = vunpack.c.l.b16 %v450
        %v483 = vunpack.c.l.b16 %v451
        %v484 = vunpack.c.l.b16 %v452
        %v485 = vunpack.c.l.b16 %v453
        %v486 = vunpack.c.l.b16 %v454
        %v487 = vunpack.c.l.b16 %v455
        %v488 = vunpack.c.l.b16 %v456
        %v489 = vpack.c.b16 %v474, %v473
        %v490 = vpack.c.b16 %v476, %v475
        %v491 = vpack.c.b16 %v478, %v477
        %v492 = vpack.c.b16 %v480, %v479
        %v493 = vpack.c.b16 %v482, %v481
        %v494 = vpack.c.b16 %v484, %v483
        %v495 = vpack.c.b16 %v486, %v485
        %v496 = vpack.c.b16 %v488, %v487
        %505 = vmatprep.subr.bf16.mxu0 0
        %506 = vmatpush1.bf16.msra.mxu0 %v496
        %507 = vmatprep.subr.bf16.mxu0 0
        %508 = vmatpush1.bf16.msra.mxu0 %v495
        %509 = vmatprep.subr.bf16.mxu0 0
        %510 = vmatpush1.bf16.msra.mxu0 %v494
        %511 = vmatprep.subr.bf16.mxu0 0
        %512 = vmatpush1.bf16.msra.mxu0 %v493
        %513 = vmatprep.subr.bf16.mxu0 0
        %514 = vmatpush1.bf16.msra.mxu0 %v492
        %515 = vmatprep.subr.bf16.mxu0 0
        %516 = vmatpush1.bf16.msra.mxu0 %v491
        %517 = vmatprep.subr.bf16.mxu0 0
        %518 = vmatpush1.bf16.msra.mxu0 %v490
        %519 = vmatprep.subr.bf16.mxu0 0
        %520 = vmatpush1.bf16.msra.mxu0 %v489
        %521 = vmatprep.subr.bf16.mxu0 0
        %522 = vmatpush2.bf16.msra.mxu0 0
        %523 = vmatprep.subr.bf16.mxu0 0
        %524 = vmatpush2.bf16.msra.mxu0 0
        %525 = vmatprep.subr.bf16.mxu0 0
        %526 = vmatpush2.bf16.msra.mxu0 0
        %527 = vmatprep.subr.bf16.mxu0 0
        %528 = vmatpush2.bf16.msra.mxu0 0
        %529 = vmatprep.subr.bf16.mxu0 0
        %530 = vmatpush2.bf16.msra.mxu0 0
        %531 = vmatprep.subr.bf16.mxu0 0
        %532 = vmatpush2.bf16.msra.mxu0 0
        %533 = vmatprep.subr.bf16.mxu0 0
        %534 = vmatpush2.bf16.msra.mxu0 0
        %535 = vmatprep.subr.bf16.mxu0 0
        %536 = vmatpush2.bf16.msra.mxu0 0
        %537 = vmatprep.mubr.bf16.mxu0 0
        %538 = vmatmul.mubr.bf16.gmra.mxu0 %v440
        %v539 = vpop.f32.mrf.mxu0
        %v540 = vadd.f32 0.0, %v539
        %v541 = vpop.f32.mrf.mxu0
        %v542 = vpop.f32.mrf.mxu0
        %v543 = vpop.f32.mrf.mxu0
        %544 = vdwg.mxu0
        %v545 = vadd.f32 %v439, %v540
        %546 = vst [vmem:[#allocation2] sm:$0xff] %v545
        // Predicated region
        $region57: #{tpu_custom_call.1} parent=39 // pred_check
          %p547 = pneg %p312
        $region58: #{tpu_custom_call.1} parent=39 // pred_check_branch
          %549 = sbr.rel (%p547) target = $region60
        $region59: #{tpu_custom_call.1} parent=39 // pred_region
          %v550 = vld [vmem:[#allocation2] sm:$0xff]
          %v551 = vld [vmem:[%s4] sm:$0x1]
          %v553 = vlaneseq
          %v554 = vshrl.u32 %v553, 7
          %v555 = vsub.s32 0, %v554
          %v556 = vrot.slane %v551, %v555
          %v558 = vadd.f32 %v550, %v556
          %559 = vst [vmem:[%s306] sm:$0xff] %v558
        $region60: #{tpu_custom_call.1} parent=39 // pred_fallthru
          _
        %s560 = sand.u32 %s168, 1
        %s561 = scalar_lea.sflag [#allocation5], %s560
        %s562 = sand.u32 %s168, 1
        %s563 = smul.addr %s562, 8
        %s564 = scalar_lea.vmem [#allocation9], %s563
        // Predicated region
        $region61: #{tpu_custom_call.1} parent=39 // pred_check
          %p565 = pneg %p178
        $region62: #{tpu_custom_call.1} parent=39 // pred_check_branch
          %567 = sbr.rel (%p565) target = $region64
        $region63: #{tpu_custom_call.1} parent=39 // pred_region
          %s569 = ssub.s32 128, 128
          %570 = vsyncadd %s561, %s569
          %s571 = smul.addr %s27, 128
          %s572 = scalar_lea.hbm %s5, %s571
          %s574 = sshll.u32 %s564, 4
          %s575 = int_to_ptr.vmem [resolvable:$true] %s574
          %577 = dma.vmem_to_hbm [thread:$0]  %s575, 128, %s572, %s561
        $region64: #{tpu_custom_call.1} parent=39 // pred_fallthru
          _
      $region40: #{tpu_custom_call.1} parent=5 // pred_fallthru
        _
      %p578 = scmp.le.s32.totalorder 2, %s18
      // Predicated region
      $region65: #{tpu_custom_call.1} parent=5 // pred_check
        %p579 = pneg %p578
      $region66: #{tpu_custom_call.1} parent=5 // pred_check_branch
        %581 = sbr.rel (%p579) target = $region68
      $region67: #{tpu_custom_call.1} parent=5 // pred_region
        %s582 = ssub.s32 %s18, 2
        // Predicated region
        $region69: #{tpu_custom_call.1} parent=67 // pred_check
          %p583 = pneg %p184
        $region70: #{tpu_custom_call.1} parent=67 // pred_check_branch
          %585 = sbr.rel (%p583) target = $region72
        $region71: #{tpu_custom_call.1} parent=67 // pred_region
          %s586 = sand.u32 %s169, 1
          %s587 = scalar_lea.sflag [#allocation5], %s586
          %s588 = sand.u32 %s169, 1
          %s589 = smul.addr %s588, 8
          %s590 = scalar_lea.vmem [#allocation9], %s589
          %591 = dma.done %s587, 128
        $region72: #{tpu_custom_call.1} parent=67 // pred_fallthru
          _
      $region68: #{tpu_custom_call.1} parent=5 // pred_fallthru
        _
    $region6: #{tpu_custom_call.1} parent=1 // loop_footer
      %s22 = sadd.s32 1, %s18
    $region7: #{tpu_custom_call.1} parent=1 // loop_footer_branch
      %17 = sbr.rel target = $region3
    $region8: #{tpu_custom_call.1} parent=1 // loop_exit
      _
    %592 = vsyncpa [#allocation4], 1
    %s593 = scalar_lea.sflag [#allocation4], 1
    %594 = vsyncpa %s593, 1
    %595 = vsyncpa [#allocation7], 1
    %596 = vsyncpa [#allocation5], 1
    %s597 = scalar_lea.sflag [#allocation5], 1
    %598 = vsyncpa %s597, 1

</llo_original>
